<compile_context>
chip_gen: v6e
topology: v6e:2x2x1
jax: 0.10.0
libtpu: 0.0.40
codegen_flags: <defaults>
</compile_context>

<pallas_src>
import functools

import jax
import jax.numpy as jnp
from jax.experimental import pallas as pl
from jax.experimental.pallas import tpu as pltpu


def _l2norm_kernel(x_ref, o_ref, *, eps):
    x = x_ref[...]                                           # [tr, D], native dtype
    xf = x.astype(jnp.float32)
    ssq = jnp.sum(xf * xf, axis=-1, keepdims=True)           # [tr, 1]  (XLU reduce, f32)
    inv = pl.reciprocal(jnp.sqrt(ssq) + eps, approx=False)   # [tr, 1]  per-row scale
    if x.dtype == jnp.float32:
        o_ref[...] = xf * inv
    else:
        # Keep the full [tr, D] multiply in the narrow dtype (bf16 VPU on v6e/v7x);
        # only the tiny [tr, 1] column was computed in f32.
        o_ref[...] = (x * inv.astype(x.dtype)).astype(o_ref.dtype)


def _round_up(a, b):
    return (a + b - 1) // b * b


def l2norm(x, *, dim=-1, eps=1e-05, block_bytes=2 * 1024 * 1024):
    """x / (||x||_2(dim, keepdim) + eps), matching the PyTorch L2Norm module."""
    ndim = x.ndim
    axis = dim % ndim
    moved = axis != ndim - 1
    if moved:
        # Non-default dims: move the normalized axis to lanes (costs a transpose).
        x = jnp.moveaxis(x, axis, -1)

    work_shape = x.shape
    D = work_shape[-1]
    rows = 1
    for s in work_shape[:-1]:
        rows *= s
    x2d = x.reshape(rows, D)

    itemsize = jnp.dtype(x.dtype).itemsize
    # Native sublane packing: 8 rows for 4-byte, 16 for 2-byte, 32 for 1-byte dtypes.
    pack = 8 * max(1, 4 // itemsize)

    # Byte-budget tile: ~block_bytes of input per grid step, sublane-aligned.
    tr_budget = max(pack, (block_bytes // max(1, D * itemsize)) // pack * pack)
    # Keep the grid at >= ~8 steps when the problem allows, so the software
    # pipeline stays full and v7x's two TensorCores both get work.
    tr_split = max(pack, _round_up((rows + 7) // 8, pack))
    tr = min(tr_budget, tr_split)

    # Pad the row dimension up to a multiple of the tile (rows are independent;
    # zero rows give 0 / eps = 0, so padding is numerically harmless).
    rows_pad = _round_up(rows, tr)
    if rows_pad != rows:
        x2d = jnp.pad(x2d, ((0, rows_pad - rows), (0, 0)))

    grid = (rows_pad // tr,)

    out2d = pl.pallas_call(
        functools.partial(_l2norm_kernel, eps=eps),
        out_shape=jax.ShapeDtypeStruct((rows_pad, D), x.dtype),
        grid_spec=pltpu.PrefetchScalarGridSpec(
            num_scalar_prefetch=0,
            grid=grid,
            in_specs=[pl.BlockSpec((tr, D), lambda i: (i, 0))],
            out_specs=pl.BlockSpec((tr, D), lambda i: (i, 0)),
        ),
        compiler_params=pltpu.CompilerParams(
            dimension_semantics=("parallel",),
            vmem_limit_bytes=48 * 1024 * 1024,
        ),
    )(x2d)

    if rows_pad != rows:
        out2d = out2d[:rows]
    out = out2d.reshape(work_shape)
    if moved:
        out = jnp.moveaxis(out, -1, axis)
    return out


def _ref_l2norm(x, eps=1e-05, axis=-1):
    xf = x.astype(jnp.float32)
    n = jnp.sqrt(jnp.sum(xf * xf, axis=axis, keepdims=True))
    return (xf / (n + eps)).astype(x.dtype)


if __name__ == "__main__":
    key = jax.random.PRNGKey(0)

    # Main check: batch=2, seq=8, hidden=128 (f32).
    x = jax.random.normal(key, (2, 8, 128), dtype=jnp.float32)
    y = l2norm(x)
    jax.block_until_ready(y)
    ref = x / (jnp.linalg.norm(x, ord=2, axis=-1, keepdims=True) + 1e-05)
    assert jnp.allclose(y, ref, atol=1e-5, rtol=1e-5), "f32 mismatch vs reference"

    # bf16 path (16-row sublane packing, narrow-dtype multiply).
    xb = jax.random.normal(jax.random.PRNGKey(1), (2, 8, 128), dtype=jnp.bfloat16)
    yb = l2norm(xb)
    jax.block_until_ready(yb)
    refb = _ref_l2norm(xb)
    assert jnp.allclose(yb.astype(jnp.float32), refb.astype(jnp.float32),
                        atol=2e-2, rtol=2e-2), "bf16 mismatch vs reference"

    # Odd shape: exercises the row-padding remainder path (rows=15, D=96).
    xo = jax.random.normal(jax.random.PRNGKey(2), (3, 5, 96), dtype=jnp.float32)
    yo = l2norm(xo)
    jax.block_until_ready(yo)
    refo = xo / (jnp.linalg.norm(xo, ord=2, axis=-1, keepdims=True) + 1e-05)
    assert jnp.allclose(yo, refo, atol=1e-5, rtol=1e-5), "padded-rows mismatch vs reference"

    print("KERNEL_OK")
</pallas_src>

<mosaic_0001>
module attributes {stable_mosaic.version = 11 : i64} {
  func.func @_l2norm_kernel(%arg0: i32, %arg1: memref<8x128xf32, #tpu.memory_space<vmem>>, %arg2: memref<8x128xf32, #tpu.memory_space<vmem>>) attributes {dimension_semantics = [#tpu.dimension_semantics<parallel>], iteration_bounds = array<i64: 2>, scalar_prefetch = 0 : i64, scratch_operands = 0 : i64, tpu.core_type = #tpu.core_type<tc>, window_params = [{transform_indices = @transform_0, window_bounds = array<i64: 8, 128>}, {transform_indices = @transform_1, window_bounds = array<i64: 8, 128>}]} {
    %c0 = arith.constant 0 : index
    %c0_0 = arith.constant 0 : index
    %0 = vector.load %arg1[%c0, %c0_0] : memref<8x128xf32, #tpu.memory_space<vmem>>, vector<8x128xf32>
    %1 = arith.mulf %0, %0 : vector<8x128xf32>
    %cst = arith.constant dense<0.000000e+00> : vector<8xf32>
    %2 = vector.multi_reduction <add>, %1, %cst [1] : vector<8x128xf32> to vector<8xf32>
    %3 = vector.shape_cast %2 : vector<8xf32> to vector<8x1xf32>
    %4 = math.sqrt %3 : vector<8x1xf32>
    %cst_1 = arith.constant 9.99999974E-6 : f32
    %5 = vector.broadcast %cst_1 : f32 to vector<8x1xf32>
    %6 = arith.addf %4, %5 : vector<8x1xf32>
    %7 = tpu.reciprocal %6 : vector<8x1xf32> -> vector<8x1xf32>
    %8 = vector.broadcast %7 : vector<8x1xf32> to vector<8x128xf32>
    %9 = arith.mulf %0, %8 : vector<8x128xf32>
    %c0_2 = arith.constant 0 : index
    %c0_3 = arith.constant 0 : index
    %10 = vector.load %arg2[%c0_2, %c0_3] : memref<8x128xf32, #tpu.memory_space<vmem>>, vector<8x128xf32>
    tpu.vector_store %arg2[%c0_2, %c0_3], %9 {strides = array<i32>} : memref<8x128xf32, #tpu.memory_space<vmem>>, vector<8x128xf32>,
    return
  }
  func.func @transform_0(%arg0: i32) -> (i32, i32) {
    %c0_i32 = arith.constant 0 : i32
    %c0_i32_0 = arith.constant 0 : i32
    return %arg0, %c0_i32 : i32, i32
  }
  func.func @transform_1(%arg0: i32) -> (i32, i32) {
    %c0_i32 = arith.constant 0 : i32
    %c0_i32_0 = arith.constant 0 : i32
    return %arg0, %c0_i32 : i32, i32
  }
}

</mosaic_0001>

<llo_original>
// kernel: tpu_custom_call.1
$region0: #{tpu_custom_call.1}
  #allocation0 [shape = 'u32[]', space=smem, size = 0x4, offset = 0x4, fixed_abs, tag = 'smem constant byte address 0x4 - core index']
  #allocation1 [shape = 'u32[144,128]{1,0:T(1,128)}', space=vmem, size = 0x12000, scoped, tag = 'internal scratch']
  %s0 = inlined_call_operand.hbm [shape: f32[16,128], index: 0, kind: input, shape index: {}]
  %s1 = inlined_call_operand.hbm [shape: f32[16,128], index: 1, kind: output, shape index: {}]
  %s2 = sld [smem:[#allocation0]]
  $region41: #{tpu_custom_call.1} parent=0
    _
  %s4 = ssub.s32 1, %s2
  %s5 = scalar_select 0, %s4, %s2
  $region1: #{tpu_custom_call.1} parent=0
    #allocation2 [shape = 'u8[8192]{0}', space=vmem, size = 0x2000, scoped, tag = 'input window, operand 0']
    #allocation3 [shape = 's32[2]{0}', space=sflag, size = 0x8, scoped, tag = 'scoped memory for tpu_custom_call.1']
    #allocation4 [shape = 's32[2]{0}', space=sflag, size = 0x8, scoped, tag = 'scoped memory for tpu_custom_call.1']
    #allocation5 [shape = 'u8[8192]{0}', space=vmem, size = 0x2000, scoped, tag = 'output window, operand 0']
    %6 = vsyncpa [#allocation3], 0
    %s7 = scalar_lea.sflag [#allocation3], 1
    %8 = vsyncpa %s7, 0
    %9 = vsyncpa [#allocation4], 0
    %s10 = scalar_lea.sflag [#allocation4], 1
    %11 = vsyncpa %s10, 0
    loop: start=0, step=1, limit=4
    $region2: #{tpu_custom_call.1} parent=1 // loop_pre_header
      _
    $region3: #{tpu_custom_call.1} parent=1 // loop_header
      %s13 = sphi 0, %s17
      %p14 = scmp.ge.s32.totalorder %s13, 4
      %s23 = sphi 0, %s25
      %s26 = sphi 0, %s23
      %s27 = sphi 0, %s26
      %s43 = sphi 0, %s27
      %s49 = sphi 0, %s51
      %s52 = sphi 0, %s49
      %s53 = sphi 0, %s52
      %s69 = sphi 0, %s53
    $region4: #{tpu_custom_call.1} parent=1 // loop_header_branch
      %16 = sbr.rel (%p14) target = $region8
    $region5: #{tpu_custom_call.1} parent=1 // loop_body
      %s18 = ssub.s32 %s13, 1
      %s19 = ssub.s32 %s13, 2
      %s20 = sadd.s32 %s13, 1
      %s21 = ssub.s32 %s13, %s20
      %p22 = scmp.eq.s32.totalorder %s21, 0
      %s24 = sadd.s32 %s23, 1
      %s25 = scalar_select %p22, %s23, %s24
      %p28 = pneg %p22
      %p29 = scmp.eq.s32.totalorder %s13, 1
      %p30 = por %p28, %p29
      %p31 = scmp.ne.s32.totalorder %s23, %s26
      %p32 = scmp.eq.s32.totalorder %s13, 0
      %p33 = por %p31, %p32
      %p34 = scmp.ne.s32.totalorder %s23, %s26
      %p35 = scmp.eq.s32.totalorder %s18, 1
      %p36 = por %p34, %p35
      %p37 = scmp.ne.s32.totalorder %s26, %s27
      %p38 = scmp.eq.s32.totalorder %s18, 0
      %p39 = por %p37, %p38
      %p40 = scmp.ne.s32.totalorder %s26, %s27
      %p41 = scmp.eq.s32.totalorder %s19, 1
      %p42 = por %p40, %p41
      %p44 = scmp.ne.s32.totalorder %s27, %s43
      %p45 = scmp.eq.s32.totalorder %s19, 0
      %p46 = por %p44, %p45
      %s47 = ssub.s32 %s13, %s20
      %p48 = scmp.eq.s32.totalorder %s47, 0
      %s50 = sadd.s32 %s49, 1
      %s51 = scalar_select %p48, %s49, %s50
      %p54 = pneg %p48
      %p55 = scmp.eq.s32.totalorder %s13, 1
      %p56 = por %p54, %p55
      %p57 = scmp.ne.s32.totalorder %s49, %s52
      %p58 = scmp.eq.s32.totalorder %s13, 0
      %p59 = por %p57, %p58
      %p60 = scmp.ne.s32.totalorder %s49, %s52
      %p61 = scmp.eq.s32.totalorder %s18, 1
      %p62 = por %p60, %p61
      %p63 = scmp.ne.s32.totalorder %s52, %s53
      %p64 = scmp.eq.s32.totalorder %s18, 0
      %p65 = por %p63, %p64
      %p66 = scmp.ne.s32.totalorder %s52, %s53
      %p67 = scmp.eq.s32.totalorder %s19, 1
      %p68 = por %p66, %p67
      %p70 = scmp.ne.s32.totalorder %s53, %s69
      %p71 = scmp.eq.s32.totalorder %s19, 0
      %p72 = por %p70, %p71
      %p73 = scmp.le.s32.totalorder 1, %s13
      %p74 = scmp.lt.s32.totalorder %s13, 3
      %p75 = pnand %p73, %p74
      %p76 = pneg %p75
      // Predicated region
      $region9: #{tpu_custom_call.1} parent=5 // pred_check
        _
      $region10: #{tpu_custom_call.1} parent=5 // pred_check_branch
        %78 = sbr.rel (%p75) target = $region12
      $region11: #{tpu_custom_call.1} parent=5 // pred_region
        %s79 = ssub.s32 %s13, 1
      $region12: #{tpu_custom_call.1} parent=5 // pred_fallthru
        _
      %p80 = scmp.lt.s32.totalorder %s13, 2
      // Predicated region
      $region13: #{tpu_custom_call.1} parent=5 // pred_check
        %p81 = pneg %p80
      $region14: #{tpu_custom_call.1} parent=5 // pred_check_branch
        %83 = sbr.rel (%p81) target = $region16
      $region15: #{tpu_custom_call.1} parent=5 // pred_region
        // Predicated region
        $region17: #{tpu_custom_call.1} parent=15 // pred_check
          %p84 = pneg %p33
        $region18: #{tpu_custom_call.1} parent=15 // pred_check_branch
          %86 = sbr.rel (%p84) target = $region20
        $region19: #{tpu_custom_call.1} parent=15 // pred_region
          %s87 = sand.u32 %s23, 1
          %s88 = scalar_lea.sflag [#allocation3], %s87
          %s89 = sand.u32 %s23, 1
          %s90 = smul.addr %s89, 8
          %s91 = scalar_lea.vmem [#allocation2], %s90
          %s93 = ssub.s32 128, 128
          %94 = vsyncadd %s88, %s93
          %s95 = smul.addr %s13, 128
          %s96 = scalar_lea.hbm %s0, %s95
          %s98 = sshll.u32 %s91, 4
          %s99 = int_to_ptr.vmem [resolvable:$true] %s98
          %101 = dma.hbm_to_vmem [thread:$0]  %s96, 128, %s99, %s88
        $region20: #{tpu_custom_call.1} parent=15 // pred_fallthru
          _
      $region16: #{tpu_custom_call.1} parent=5 // pred_fallthru
        _
      %p102 = scmp.le.s32.totalorder 1, %s13
      %p103 = scmp.lt.s32.totalorder %s13, 3
      %p104 = pnand %p102, %p103
      %p105 = pneg %p104
      // Predicated region
      $region21: #{tpu_custom_call.1} parent=5 // pred_check
        _
      $region22: #{tpu_custom_call.1} parent=5 // pred_check_branch
        %107 = sbr.rel (%p104) target = $region24
      $region23: #{tpu_custom_call.1} parent=5 // pred_region
        %s108 = ssub.s32 %s13, 1
        %s109 = sand.u32 %s26, 1
        %s110 = scalar_lea.sflag [#allocation3], %s109
        %s111 = sand.u32 %s26, 1
        %s112 = smul.addr %s111, 8
        %s113 = scalar_lea.vmem [#allocation2], %s112
        // Predicated region
        $region25: #{tpu_custom_call.1} parent=23 // pred_check
          %p114 = pneg %p39
        $region26: #{tpu_custom_call.1} parent=23 // pred_check_branch
          %116 = sbr.rel (%p114) target = $region28
        $region27: #{tpu_custom_call.1} parent=23 // pred_region
          %117 = dma.done %s110, 128
        $region28: #{tpu_custom_call.1} parent=23 // pred_fallthru
          _
        %s118 = sand.u32 %s26, 1
        %s119 = scalar_lea.sflag [#allocation3], %s118
        %s120 = sand.u32 %s26, 1
        %s121 = smul.addr %s120, 8
        %s122 = scalar_lea.vmem [#allocation2], %s121
        %p123 = pneg %p39
        %p124 = pneg %p36
        %p125 = pneg %p65
        %p126 = pneg %p62
        %s127 = sand.u32 %s52, 1
        %s128 = scalar_lea.sflag [#allocation4], %s127
        %s129 = sand.u32 %s52, 1
        %s130 = smul.addr %s129, 8
        %s131 = scalar_lea.vmem [#allocation5], %s130
        %v132 = vld [vmem:[%s113] sm:$0xff]
        %v133 = vmul.f32 %v132, %v132
        %134 = vadd.xlane.f32.xlu0 %v133
        %v135 = vpop.xlane.xlu0 %134
        %v136 = vrsqrt.pop %v135
        %v137 = vmul.f32 %v135, %v136
        %vm138 = vcmp.eq.f32.partialorder %v135, inf
        %v139 = vsel %vm138, %v135, %v137
        %vm140 = vcmp.eq.f32.partialorder %v135, 0.0
        %v141 = vand.u32 %v135, 2147483648
        %v142 = vsel %vm140, %v141, %v139
        %v143 = vadd.f32 %v142, 1e-05
        %v144 = vrcp.pop %v143
        %v145 = vmul.f32 %v132, %v144
        %146 = vst [vmem:[%s131] sm:$0xff] %v145
        %s147 = sand.u32 %s52, 1
        %s148 = scalar_lea.sflag [#allocation4], %s147
        %s149 = sand.u32 %s52, 1
        %s150 = smul.addr %s149, 8
        %s151 = scalar_lea.vmem [#allocation5], %s150
        // Predicated region
        $region29: #{tpu_custom_call.1} parent=23 // pred_check
          %p152 = pneg %p62
        $region30: #{tpu_custom_call.1} parent=23 // pred_check_branch
          %154 = sbr.rel (%p152) target = $region32
        $region31: #{tpu_custom_call.1} parent=23 // pred_region
          %s156 = ssub.s32 128, 128
          %157 = vsyncadd %s148, %s156
          %s158 = smul.addr %s18, 128
          %s159 = scalar_lea.hbm %s1, %s158
          %s161 = sshll.u32 %s151, 4
          %s162 = int_to_ptr.vmem [resolvable:$true] %s161
          %164 = dma.vmem_to_hbm [thread:$0]  %s162, 128, %s159, %s148
        $region32: #{tpu_custom_call.1} parent=23 // pred_fallthru
          _
      $region24: #{tpu_custom_call.1} parent=5 // pred_fallthru
        _
      %p165 = scmp.le.s32.totalorder 2, %s13
      // Predicated region
      $region33: #{tpu_custom_call.1} parent=5 // pred_check
        %p166 = pneg %p165
      $region34: #{tpu_custom_call.1} parent=5 // pred_check_branch
        %168 = sbr.rel (%p166) target = $region36
      $region35: #{tpu_custom_call.1} parent=5 // pred_region
        %s169 = ssub.s32 %s13, 2
        // Predicated region
        $region37: #{tpu_custom_call.1} parent=35 // pred_check
          %p170 = pneg %p68
        $region38: #{tpu_custom_call.1} parent=35 // pred_check_branch
          %172 = sbr.rel (%p170) target = $region40
        $region39: #{tpu_custom_call.1} parent=35 // pred_region
          %s173 = sand.u32 %s53, 1
          %s174 = scalar_lea.sflag [#allocation4], %s173
          %s175 = sand.u32 %s53, 1
          %s176 = smul.addr %s175, 8
          %s177 = scalar_lea.vmem [#allocation5], %s176
          %178 = dma.done %s174, 128
        $region40: #{tpu_custom_call.1} parent=35 // pred_fallthru
          _
      $region36: #{tpu_custom_call.1} parent=5 // pred_fallthru
        _
    $region6: #{tpu_custom_call.1} parent=1 // loop_footer
      %s17 = sadd.s32 1, %s13
    $region7: #{tpu_custom_call.1} parent=1 // loop_footer_branch
      %12 = sbr.rel target = $region3
    $region8: #{tpu_custom_call.1} parent=1 // loop_exit
      _
    %179 = vsyncpa [#allocation3], 1
    %s180 = scalar_lea.sflag [#allocation3], 1
    %181 = vsyncpa %s180, 1
    %182 = vsyncpa [#allocation4], 1
    %s183 = scalar_lea.sflag [#allocation4], 1
    %184 = vsyncpa %s183, 1

</llo_original>
